<compile_context>
chip_gen: v5e
topology: v5e:2x2
jax: 0.10.0
libtpu: 0.0.40
codegen_flags: <defaults>
</compile_context>

<pallas_src>
import jax
import jax.numpy as jnp
from jax.experimental import pallas as pl
from jax.experimental.pallas import tpu as pltpu


# ----------------------------- Pallas kernel --------------------------------
def qlinear_fused_kernel(x_ref, wq_ref, params_ref, out_ref):
    """Fused: per-tensor int8 activation quant + quantized linear + dequant.

    x_ref:      [M, K] f32   raw activations
    wq_ref:     [K, N] bf16  per-channel-quantized weight values (int-valued,
                             |wq| <= 127, exact in bf16), pre-transposed
    params_ref: [3, N] f32   row0 = sw[n], row1 = sw[n]*sum_k(wq[n,k]),
                             row2 = bias[n]
    out_ref:    [M, N] f32
    """
    x = x_ref[...]                                           # [M, K] f32

    # ---- per-tensor affine int8 activation quantization (dynamic) ----
    xmin = jnp.min(jnp.min(x, axis=-1, keepdims=True), axis=0, keepdims=True)
    xmax = jnp.max(jnp.max(x, axis=-1, keepdims=True), axis=0, keepdims=True)
    xmin = jnp.minimum(xmin, 0.0)                            # (1,1)
    xmax = jnp.maximum(xmax, 0.0)                            # (1,1)
    sx = jnp.maximum((xmax - xmin) * (1.0 / 255.0), 1e-8)    # (1,1) act. scale
    inv_sx = 1.0 / sx                                        # one exact scalar recip
    zx = jnp.clip(jnp.round(-128.0 - xmin * inv_sx), -128.0, 127.0)   # (1,1) zp
    xq = jnp.clip(jnp.round(x * inv_sx) + zx, -128.0, 127.0)          # [M,K] int-valued

    # ---- integer matmul on the MXU (bf16 operands, f32 accumulation) ----
    acc = jax.lax.dot_general(
        xq.astype(jnp.bfloat16), wq_ref[...],
        dimension_numbers=(((1,), (0,)), ((), ())),
        preferred_element_type=jnp.float32,
    )                                                        # [M, N] exact ints

    # ---- dequant epilogue, activation zero-point folded into the bias ----
    params = params_ref[...]                                 # [3, N]
    sw = params[0:1, :]                                      # (1, N)
    sw_rowsum = params[1:2, :]                               # (1, N)
    bias = params[2:3, :]                                    # (1, N)
    out_ref[...] = acc * (sx * sw) + (bias - (sx * zx) * sw_rowsum)


def qlinear_pallas(x2, wq_t, params):
    """x2: [M, K] f32, wq_t: [K, N] bf16, params: [3, N] f32 -> [M, N] f32."""
    M, K = x2.shape
    _, N = wq_t.shape
    cost = pl.CostEstimate(
        flops=2 * M * K * N,
        transcendentals=0,
        bytes_accessed=4 * M * K + 2 * K * N + 4 * 3 * N + 4 * M * N,
    )
    return pl.pallas_call(
        qlinear_fused_kernel,
        out_shape=jax.ShapeDtypeStruct((M, N), jnp.float32),
        # grid=(): the whole problem is one block (a few KiB of VMEM).
        in_specs=[
            pl.BlockSpec((M, K), lambda: (0, 0)),   # raw activations
            pl.BlockSpec((K, N), lambda: (0, 0)),   # quantized weight, [K, N]
            pl.BlockSpec((3, N), lambda: (0, 0)),   # packed epilogue constants
        ],
        out_specs=pl.BlockSpec((M, N), lambda: (0, 0)),
        cost_estimate=cost,
    )(x2, wq_t, params)


# ------------------------- one-time weight prep ------------------------------
def prepare_qlinear(weight, bias):
    """Per-output-channel symmetric int8 weight quantization + packing.

    Call ONCE at model init; the returned arrays are reused every forward.
    weight: [N, K] f32, bias: [N] f32
    returns (wq_t [K, N] bf16, params [3, N] f32)
    """
    sw = jnp.maximum(jnp.max(jnp.abs(weight), axis=1), 1e-8) / 127.0        # [N]
    wq = jnp.clip(jnp.round(weight / sw[:, None]), -127.0, 127.0)           # [N,K]
    wq_rowsum = jnp.sum(wq, axis=1)                                         # [N]
    wq_t = wq.T.astype(jnp.bfloat16)            # [K, N]; int8-range values exact in bf16
    params = jnp.stack([sw, sw * wq_rowsum, bias], axis=0).astype(jnp.float32)  # [3, N]
    return wq_t, params


# ------------------------------- forward -------------------------------------
@jax.jit
def qlinear_forward(x, wq_t, params):
    """Quantized forward of M on multi-dim input x: [..., K] -> [..., N]."""
    K = x.shape[-1]
    N = wq_t.shape[-1]
    lead = x.shape[:-1]
    x2 = x.reshape(-1, K).astype(jnp.float32)
    y = qlinear_pallas(x2, wq_t, params)
    return y.reshape(*lead, N)


if __name__ == "__main__":
    key = jax.random.PRNGKey(0)
    kx, kw, kb = jax.random.split(key, 3)

    B, S, K, N = 2, 8, 16, 32          # multi-dim input [2, 8, 16], Linear(16, 32)
    x = jax.random.normal(kx, (B, S, K), dtype=jnp.float32)
    weight = jax.random.normal(kw, (N, K), dtype=jnp.float32) * 0.1
    bias = jax.random.normal(kb, (N,), dtype=jnp.float32) * 0.1

    # one-time "model init": weight-side quantization + packing
    wq_t, params = jax.block_until_ready(prepare_qlinear(weight, bias))

    y = jax.block_until_ready(qlinear_forward(x, wq_t, params))

    # ---- pure-JAX reference of the exact same quantized math ----
    x2 = x.reshape(B * S, K)
    xmin = jnp.minimum(jnp.min(x2), 0.0)
    xmax = jnp.maximum(jnp.max(x2), 0.0)
    sx = jnp.maximum((xmax - xmin) * (1.0 / 255.0), 1e-8)
    inv_sx = 1.0 / sx
    zx = jnp.clip(jnp.round(-128.0 - xmin * inv_sx), -128.0, 127.0)
    xq = jnp.clip(jnp.round(x2 * inv_sx) + zx, -128.0, 127.0)
    acc = xq @ wq_t.astype(jnp.float32)                                      # [M, N]
    y_ref = (acc * (sx * params[0:1, :])
             + (params[2:3, :] - (sx * zx) * params[1:2, :])).reshape(B, S, N)
    assert jnp.allclose(y, y_ref, atol=1e-4, rtol=1e-4), "mismatch vs quantized reference"

    # Sanity: close to the fp32 Linear up to quantization error
    y_fp = x @ weight.T + bias
    assert float(jnp.max(jnp.abs(y - y_fp))) < 0.1, "quantization error unexpectedly large"

    print("KERNEL_OK")
</pallas_src>

<mosaic_0001>
module attributes {stable_mosaic.version = 11 : i64} {
  func.func @qlinear_fused_kernel(%arg0: memref<16x16xf32, #tpu.memory_space<vmem>>, %arg1: memref<16x32xbf16, #tpu.memory_space<vmem>>, %arg2: memref<3x32xf32, #tpu.memory_space<vmem>>, %arg3: memref<16x32xf32, #tpu.memory_space<vmem>>) attributes {dimension_semantics = [], scalar_prefetch = 0 : i64, scratch_operands = 0 : i64, tpu.core_type = #tpu.core_type<tc>} {
    %c0 = arith.constant 0 : index
    %c0_0 = arith.constant 0 : index
    %0 = vector.load %arg0[%c0, %c0_0] : memref<16x16xf32, #tpu.memory_space<vmem>>, vector<16x16xf32>
    %cst = arith.constant dense<0x7F800000> : vector<16xf32>
    %1 = vector.multi_reduction <minimumf>, %0, %cst [1] : vector<16x16xf32> to vector<16xf32>
    %2 = vector.shape_cast %1 : vector<16xf32> to vector<16x1xf32>
    %cst_1 = arith.constant dense<0x7F800000> : vector<1xf32>
    %3 = vector.multi_reduction <minimumf>, %2, %cst_1 [0] : vector<16x1xf32> to vector<1xf32>
    %4 = vector.shape_cast %3 : vector<1xf32> to vector<1x1xf32>
    %cst_2 = arith.constant dense<0xFF800000> : vector<16xf32>
    %5 = vector.multi_reduction <maximumf>, %0, %cst_2 [1] : vector<16x16xf32> to vector<16xf32>
    %6 = vector.shape_cast %5 : vector<16xf32> to vector<16x1xf32>
    %cst_3 = arith.constant dense<0xFF800000> : vector<1xf32>
    %7 = vector.multi_reduction <maximumf>, %6, %cst_3 [0] : vector<16x1xf32> to vector<1xf32>
    %8 = vector.shape_cast %7 : vector<1xf32> to vector<1x1xf32>
    %cst_4 = arith.constant 0.000000e+00 : f32
    %9 = vector.broadcast %cst_4 : f32 to vector<1x1xf32>
    %10 = arith.minimumf %4, %9 : vector<1x1xf32>
    %cst_5 = arith.constant 0.000000e+00 : f32
    %11 = vector.broadcast %cst_5 : f32 to vector<1x1xf32>
    %12 = arith.maximumf %8, %11 : vector<1x1xf32>
    %13 = arith.subf %12, %10 : vector<1x1xf32>
    %cst_6 = arith.constant 0.00392156886 : f32
    %14 = vector.broadcast %cst_6 : f32 to vector<1x1xf32>
    %15 = arith.mulf %13, %14 : vector<1x1xf32>
    %cst_7 = arith.constant 9.99999993E-9 : f32
    %16 = vector.broadcast %cst_7 : f32 to vector<1x1xf32>
    %17 = arith.maximumf %15, %16 : vector<1x1xf32>
    %cst_8 = arith.constant 1.000000e+00 : f32
    %18 = vector.broadcast %cst_8 : f32 to vector<1x1xf32>
    %19 = arith.divf %18, %17 : vector<1x1xf32>
    %20 = arith.mulf %10, %19 : vector<1x1xf32>
    %cst_9 = arith.constant -1.280000e+02 : f32
    %21 = vector.broadcast %cst_9 : f32 to vector<1x1xf32>
    %22 = arith.subf %21, %20 : vector<1x1xf32>
    %23 = math.roundeven %22 : vector<1x1xf32>
    %cst_10 = arith.constant -1.280000e+02 : f32
    %cst_11 = arith.constant 1.270000e+02 : f32
    %24 = vector.broadcast %cst_10 : f32 to vector<1x1xf32>
    %25 = arith.maximumf %24, %23 : vector<1x1xf32>
    %26 = vector.broadcast %cst_11 : f32 to vector<1x1xf32>
    %27 = arith.minimumf %26, %25 : vector<1x1xf32>
    %28 = vector.broadcast %19 : vector<1x1xf32> to vector<16x16xf32>
    %29 = arith.mulf %0, %28 : vector<16x16xf32>
    %30 = math.roundeven %29 : vector<16x16xf32>
    %31 = vector.broadcast %27 : vector<1x1xf32> to vector<16x16xf32>
    %32 = arith.addf %30, %31 : vector<16x16xf32>
    %cst_12 = arith.constant -1.280000e+02 : f32
    %cst_13 = arith.constant 1.270000e+02 : f32
    %33 = vector.broadcast %cst_12 : f32 to vector<16x16xf32>
    %34 = arith.maximumf %33, %32 : vector<16x16xf32>
    %35 = vector.broadcast %cst_13 : f32 to vector<16x16xf32>
    %36 = arith.minimumf %35, %34 : vector<16x16xf32>
    %37 = arith.truncf %36 : vector<16x16xf32> to vector<16x16xbf16>
    %c0_14 = arith.constant 0 : index
    %c0_15 = arith.constant 0 : index
    %38 = vector.load %arg1[%c0_14, %c0_15] : memref<16x32xbf16, #tpu.memory_space<vmem>>, vector<16x32xbf16>
    %cst_16 = arith.constant dense<0.000000e+00> : vector<16x32xf32>
    %39 = tpu.matmul %37, %38, %cst_16 {dimension_numbers = #tpu.dot_dimension_numbers<[1], [0], [0], [1], [0, 0, 1, 1], [], []>} : vector<16x16xbf16>, vector<16x32xbf16>, vector<16x32xf32> -> vector<16x32xf32>
    %c0_17 = arith.constant 0 : index
    %c0_18 = arith.constant 0 : index
    %40 = vector.load %arg2[%c0_17, %c0_18] : memref<3x32xf32, #tpu.memory_space<vmem>>, vector<3x32xf32>
    %41 = vector.extract_strided_slice %40 {offsets = [0, 0], sizes = [1, 32], strides = [1, 1]} : vector<3x32xf32> to vector<1x32xf32>
    %42 = vector.extract_strided_slice %40 {offsets = [1, 0], sizes = [1, 32], strides = [1, 1]} : vector<3x32xf32> to vector<1x32xf32>
    %43 = vector.extract_strided_slice %40 {offsets = [2, 0], sizes = [1, 32], strides = [1, 1]} : vector<3x32xf32> to vector<1x32xf32>
    %44 = vector.broadcast %17 : vector<1x1xf32> to vector<1x32xf32>
    %45 = arith.mulf %44, %41 : vector<1x32xf32>
    %46 = vector.broadcast %45 : vector<1x32xf32> to vector<16x32xf32>
    %47 = arith.mulf %39, %46 : vector<16x32xf32>
    %48 = arith.mulf %17, %27 : vector<1x1xf32>
    %49 = vector.broadcast %48 : vector<1x1xf32> to vector<1x32xf32>
    %50 = arith.mulf %49, %42 : vector<1x32xf32>
    %51 = arith.subf %43, %50 : vector<1x32xf32>
    %52 = vector.broadcast %51 : vector<1x32xf32> to vector<16x32xf32>
    %53 = arith.addf %47, %52 : vector<16x32xf32>
    %c0_19 = arith.constant 0 : index
    %c0_20 = arith.constant 0 : index
    %54 = vector.load %arg3[%c0_19, %c0_20] : memref<16x32xf32, #tpu.memory_space<vmem>>, vector<16x32xf32>
    tpu.vector_store %arg3[%c0_19, %c0_20], %53 {strides = array<i32>} : memref<16x32xf32, #tpu.memory_space<vmem>>, vector<16x32xf32>,
    return
  }
}

</mosaic_0001>

<llo_original>
// kernel: qlinear_forward.1
$region0: #{qlinear_forward.1}
  #allocation0 [shape = 'u32[]', space=smem, size = 0x4, offset = 0x4, fixed_abs, tag = 'smem constant byte address 0x4 - core index']
  #allocation1 [shape = 'u32[72,128]{1,0:T(1,128)}', space=vmem, size = 0x9000, scoped, tag = 'internal scratch']
  %s0 = inlined_call_operand.hbm [shape: f32[16,16], index: 0, kind: input, shape index: {}]
  %s1 = inlined_call_operand.hbm [shape: bf16[16,32], index: 1, kind: input, shape index: {}]
  %s2 = inlined_call_operand.hbm [shape: f32[3,32], index: 2, kind: input, shape index: {}]
  %s3 = inlined_call_operand.hbm [shape: f32[16,32], index: 3, kind: output, shape index: {}]
  %s4 = sld [smem:[#allocation0]]
  $region34: #{qlinear_forward.1} parent=0
    _
  %s6 = ssub.s32 1, %s4
  %s7 = scalar_select 0, %s6, %s4
  $region1: #{qlinear_forward.1} parent=0
    #allocation2 [shape = 'u8[8192]{0}', space=vmem, size = 0x2000, scoped, tag = 'input window, operand 0, single buffered']
    #allocation3 [shape = 's32[1]{0}', space=sflag, size = 0x4, scoped, tag = 'scoped memory for qlinear_forward.1']
    #allocation4 [shape = 's32[1]{0}', space=sflag, size = 0x4, scoped, tag = 'scoped memory for qlinear_forward.1']
    #allocation5 [shape = 'u8[4096]{0}', space=vmem, size = 0x1000, scoped, tag = 'input window, operand 1, single buffered']
    #allocation6 [shape = 's32[1]{0}', space=sflag, size = 0x4, scoped, tag = 'scoped memory for qlinear_forward.1']
    #allocation7 [shape = 'u8[2048]{0}', space=vmem, size = 0x800, scoped, tag = 'input window, operand 2, single buffered']
    #allocation8 [shape = 'u8[8192]{0}', space=vmem, size = 0x2000, scoped, tag = 'output window, operand 0, single buffered']
    %8 = vsyncpa [#allocation3], 0
    %9 = vsyncpa [#allocation6], 0
    %10 = vsyncpa [#allocation4], 0
    // Predicated region
    $region2: #{qlinear_forward.1} parent=1 // pred_check
      _
    $region3: #{qlinear_forward.1} parent=1 // pred_check_branch
      %12 = sbr.rel (0) target = $region5
    $region4: #{qlinear_forward.1} parent=1 // pred_region
      %14 = vsyncadd [#allocation3], 0
      %s15 = sshll.u32 %s0, 4
      %s16 = int_to_ptr.hbm [resolvable:$true] %s15
      %s17 = sshll.u32 [#allocation2], 4
      %s18 = int_to_ptr.vmem [resolvable:$true] %s17
      %23 = dma.hbm_to_vmem [thread:$0]  %s16, 256, %s18, [#allocation3], 128, 128, 8
    $region5: #{qlinear_forward.1} parent=1 // pred_fallthru
      _
    // Predicated region
    $region6: #{qlinear_forward.1} parent=1 // pred_check
      _
    $region7: #{qlinear_forward.1} parent=1 // pred_check_branch
      %25 = sbr.rel (0) target = $region9
    $region8: #{qlinear_forward.1} parent=1 // pred_region
      %27 = vsyncadd [#allocation6], 0
      %s28 = sshll.u32 %s1, 4
      %s29 = int_to_ptr.hbm [resolvable:$true] %s28
      %s30 = sshll.u32 [#allocation5], 4
      %s31 = int_to_ptr.vmem [resolvable:$true] %s30
      %36 = dma.hbm_to_vmem [thread:$0]  %s29, 128, %s31, [#allocation6], 64, 64, 4
    $region9: #{qlinear_forward.1} parent=1 // pred_fallthru
      _
    // Predicated region
    $region10: #{qlinear_forward.1} parent=1 // pred_check
      _
    $region11: #{qlinear_forward.1} parent=1 // pred_check_branch
      %38 = sbr.rel (0) target = $region13
    $region12: #{qlinear_forward.1} parent=1 // pred_region
      %40 = vsyncadd [#allocation6], 0
      %s42 = sshll.u32 %s2, 4
      %s43 = int_to_ptr.hbm [resolvable:$true] %s42
      %s44 = sshll.u32 [#allocation7], 4
      %s45 = int_to_ptr.vmem [resolvable:$true] %s44
      %47 = dma.hbm_to_vmem [thread:$0]  %s43, 64, %s45, [#allocation6]
    $region13: #{qlinear_forward.1} parent=1 // pred_fallthru
      _
    // Predicated region
    $region14: #{qlinear_forward.1} parent=1 // pred_check
      _
    $region15: #{qlinear_forward.1} parent=1 // pred_check_branch
      %49 = sbr.rel (0) target = $region17
    $region16: #{qlinear_forward.1} parent=1 // pred_region
      %51 = dma.done [#allocation3], 256
    $region17: #{qlinear_forward.1} parent=1 // pred_fallthru
      _
    // Predicated region
    $region18: #{qlinear_forward.1} parent=1 // pred_check
      _
    $region19: #{qlinear_forward.1} parent=1 // pred_check_branch
      %53 = sbr.rel (0) target = $region21
    $region20: #{qlinear_forward.1} parent=1 // pred_region
      %55 = dma.done [#allocation6], 128
    $region21: #{qlinear_forward.1} parent=1 // pred_fallthru
      _
    // Predicated region
    $region22: #{qlinear_forward.1} parent=1 // pred_check
      _
    $region23: #{qlinear_forward.1} parent=1 // pred_check_branch
      %57 = sbr.rel (0) target = $region25
    $region24: #{qlinear_forward.1} parent=1 // pred_region
      %59 = dma.done [#allocation6], 64
    $region25: #{qlinear_forward.1} parent=1 // pred_fallthru
      _
    %v61 = vld [vmem:[#allocation2] sm:$0xff]
    %v62 = vld [vmem:[#allocation2 + $0x8] sm:$0xff]
    %vm63 = vcmask 130048
    %v64 = vsel %vm63, %v61, inf
    %65 = vmin.xlane.f32.xlu0 %v64
    %v66 = vpop.xlane.xlu0 %65
    %v67 = vsel %vm63, %v62, inf
    %68 = vmin.xlane.f32.xlu0 %v67
    %v69 = vpop.xlane.xlu0 %68
    %v70 = vmin.f32 %v66, %v69
    %v71 = vrot.slane %v70, 4
    %v72 = vmin.f32 %v70, %v71
    %v73 = vrot.slane %v72, 2
    %v74 = vmin.f32 %v72, %v73
    %v75 = vrot.slane %v74, 1
    %v76 = vmin.f32 %v74, %v75
    %v77 = vsel %vm63, %v61, -inf
    %78 = vmax.xlane.f32.xlu0 %v77
    %v79 = vpop.xlane.xlu0 %78
    %v80 = vsel %vm63, %v62, -inf
    %81 = vmax.xlane.f32.xlu0 %v80
    %v82 = vpop.xlane.xlu0 %81
    %v83 = vmax.f32 %v79, %v82
    %v84 = vrot.slane %v83, 4
    %v85 = vmax.f32 %v83, %v84
    %v86 = vrot.slane %v85, 2
    %v87 = vmax.f32 %v85, %v86
    %v88 = vrot.slane %v87, 1
    %v89 = vmax.f32 %v87, %v88
    %v90 = vmin.f32 %v76, 0.0
    %v91 = vmax.f32 %v89, 0.0
    %v92 = vsub.f32 %v91, %v90
    %v93 = vmul.f32 %v92, 0.003921569
    %v94 = vmax.f32 %v93, 1e-08
    %v95 = vrcp.pop %v94
    %v96 = vmul.f32 %v94, %v95
    %v97 = vsub.f32 1.0, %v96
    %v98 = vmul.f32 %v95, %v97
    %v99 = vadd.f32 %v95, %v98
    %vm100 = vweird.f32 %v94
    %vm101 = vweird.f32 %v95
    %vm102 = vmor %vm100, %vm101
    %v103 = vsel %vm102, %v95, %v99
    %v104 = vand.u32 2147483647, %v94
    %vm105 = vcmp.eq.f32.partialorder %v104, 8.507059e+37
    %v106 = vand.u32 %v94, 2147483648
    %v107 = vor.u32 1.1754944e-38, %v106
    %v108 = vsel %vm105, %v107, %v103
    %v109 = vmul.f32 1.0, %v108
    %v110 = vmul.f32 %v90, %v109
    %v111 = vsub.f32 -128.0, %v110
    %v112 = vround.ne.pseudo %v111
    %v113 = vmax.f32 %v112, -128.0
    %v114 = vmin.f32 %v113, 127.0
    %v115 = vmul.f32 %v61, %v109
    %v116 = vmul.f32 %v62, %v109
    %v117 = vround.ne.pseudo %v115
    %v118 = vround.ne.pseudo %v116
    %v119 = vadd.f32 %v117, %v114
    %v120 = vadd.f32 %v118, %v114
    %v121 = vmax.f32 %v119, -128.0
    %v122 = vmax.f32 %v120, -128.0
    %v123 = vmin.f32 %v121, 127.0
    %v124 = vmin.f32 %v122, 127.0
    %v125 = vpack.c.bf16 %v124, %v123
    %v126 = vld [vmem:[#allocation5] sm:$0xf]
    %v127 = vld [vmem:[#allocation5 + $0x4] sm:$0xf]
    %v130 = vunpack.c.l.b16 %v126
    %v131 = vunpack.c.l.b16 %v127
    %v132 = vpack.c.b16 %v131, %v130
    %v135 = vsel %vm63, %v125, 0
    %137 = vmatpush.bf16.msra.mxu0 0
    %138 = vmatpush.bf16.msra.mxu0 0
    %139 = vmatpush.bf16.msra.mxu0 0
    %140 = vmatpush.bf16.msra.mxu0 0
    %141 = vmatpush.bf16.msra.mxu0 0
    %142 = vmatpush.bf16.msra.mxu0 0
    %143 = vmatpush.bf16.msra.mxu0 0
    %144 = vmatpush.bf16.msra.mxu0 %v132
    %145 = vmatmul.bf16.gmra.mxu0 %v135
    %v146 = vpop.f32.mrf.mxu0
    %v147 = vadd.f32 0.0, %v146
    %v148 = vpop.f32.mrf.mxu0
    %v149 = vadd.f32 0.0, %v148
    %150 = vdwg.mxu0
    %v151 = vld [vmem:[#allocation7] sm:$0x7]
    %v152 = vmul.f32 %v94, %v151
    %v153 = vperm.slane %v152, 0
    %v154 = vmul.f32 %v147, %v153
    %v155 = vmul.f32 %v149, %v153
    %v156 = vmul.f32 %v94, %v114
    %v157 = vmul.f32 %v156, %v151
    %v159 = vrot.slane %v157, 7
    %v161 = vsub.f32 %v151, %v159
    %v162 = vperm.slane %v161, 2
    %v163 = vadd.f32 %v154, %v162
    %v164 = vadd.f32 %v155, %v162
    %vm165 = vcmask 261120
    %166 = vst.msk [vmem:[#allocation8] sm:$0xff] %vm165, %v163
    %167 = vst.msk [vmem:[#allocation8 + $0x8] sm:$0xff] %vm165, %v164
    // Predicated region
    $region26: #{qlinear_forward.1} parent=1 // pred_check
      _
    $region27: #{qlinear_forward.1} parent=1 // pred_check_branch
      %169 = sbr.rel (0) target = $region29
    $region28: #{qlinear_forward.1} parent=1 // pred_region
      %171 = vsyncadd [#allocation4], 0
      %s172 = sshll.u32 [#allocation8], 4
      %s173 = int_to_ptr.vmem [resolvable:$true] %s172
      %s174 = sshll.u32 %s3, 4
      %s175 = int_to_ptr.hbm [resolvable:$true] %s174
      %180 = dma.vmem_to_hbm [thread:$0]  %s173, 256, %s175, [#allocation4], 128, 128, 8
    $region29: #{qlinear_forward.1} parent=1 // pred_fallthru
      _
    // Predicated region
    $region30: #{qlinear_forward.1} parent=1 // pred_check
      _
    $region31: #{qlinear_forward.1} parent=1 // pred_check_branch
      %182 = sbr.rel (0) target = $region33
    $region32: #{qlinear_forward.1} parent=1 // pred_region
      %184 = dma.done [#allocation4], 256
    $region33: #{qlinear_forward.1} parent=1 // pred_fallthru
      _
    %185 = vsyncpa [#allocation3], 1
    %186 = vsyncpa [#allocation6], 1
    %187 = vsyncpa [#allocation4], 1

</llo_original>
